<compile_context>
chip_gen: v5e
topology: v5e:2x2
jax: 0.10.0
libtpu: 0.0.40
codegen_flags: <defaults>
</compile_context>

<pallas_src>
import functools
import math

import numpy as np

import jax
import jax.numpy as jnp
from jax import lax
from jax.experimental import pallas as pl
from jax.experimental.pallas import tpu as pltpu


def _round_up(x: int, m: int) -> int:
    return ((x + m - 1) // m) * m


def _mmd_tile_kernel(rows_ref, cols_ref, scale_ref,      # scalar prefetch (SMEM)
                     gr_ref,                              # (T, Dp)   row feature tile
                     gct_ref,                             # (Dp, T)   pre-transposed col tile
                     nsqr_ref,                            # (T, 1)    -0.5*||g_row||^2
                     wrow_ref,                            # (1, T)    row weights (lane layout)
                     colpk_ref,                           # (2, T)    [-0.5*||g_col||^2 ; w_col]
                     out_ref,                             # (1, T)    per-core f32 accumulator
                     *, bf16_exp: bool, clamp_nonpositive: bool):
    core = pl.program_id(0)
    step = pl.program_id(1)

    @pl.when(step == 0)
    def _init():
        out_ref[...] = jnp.zeros_like(out_ref)

    # Gram cross-term in MXU-standard layout: (T, Dp) x (Dp, T) -> (T, T) f32.
    xy = lax.dot_general(
        gr_ref[...], gct_ref[...],
        dimension_numbers=(((1,), (0,)), ((), ())),
        preferred_element_type=jnp.float32,
    )

    # arg = -||f_i - f_j||^2 / sigma  (sqrt(2)/std folded into g, 0.5 into norms):
    # just two broadcast adds, no full-tile multiply.
    arg = nsqr_ref[...] + colpk_ref[0:1, :] + xy
    if clamp_nonpositive:
        arg = jnp.minimum(arg, 0.0)            # FP-cancellation guard: exp(arg) <= 1

    if bf16_exp:
        e = jnp.exp(arg.astype(jnp.bfloat16))  # opt-in: ~2x EUP on v6e/v7x
    else:
        e = jnp.exp(arg)                       # EUP

    # Weighted row-reduction on the MXU ((1,T) @ (T,T)) instead of a (T,T) VPU
    # multiply followed by a sublane reduce (frees VALU / vst slots on v5e).
    wr = wrow_ref[...].astype(e.dtype)
    wsum = lax.dot_general(
        wr, e,
        dimension_numbers=(((1,), (0,)), ((), ())),
        preferred_element_type=jnp.float32,
    )                                           # (1, T) f32

    # Upper-triangular schedule: diagonal tiles scale 1, off-diagonal 2,
    # padded (load-balancing) pairs scale 0.
    idx = core * pl.num_programs(1) + step
    scale = scale_ref[idx].astype(jnp.float32)
    out_ref[...] += (scale * colpk_ref[1:2, :]) * wsum


def gaussian_kernel_function(fa, fb, std=1.0, *, tile_n=None,
                             use_bf16_inputs=False, use_bf16_exp=False,
                             clamp_nonpositive=True):
    """Pallas TPU implementation of Gaussian_Kernel_Function.forward (MMD loss)."""
    assert fa.ndim == 2 and fb.ndim == 2 and fa.shape[1] == fb.shape[1]
    na, d = fa.shape
    nb, _ = fb.shape
    n_total = na + nb

    d_pad = _round_up(d, 128)   # zero feature padding leaves all distances unchanged

    # Tile selection: biggest lane-aligned tile that keeps the double-buffered
    # input tiles + (T,T) f32 temporaries comfortably under v7x's 64 MiB physical
    # VMEM while amortizing the ~0.35us per-grid-step overhead.
    if tile_n is None:
        if d_pad <= 256:
            tile_n = 1024
        elif d_pad < 2048:
            tile_n = 512
        elif d_pad < 8192:
            tile_n = 256
        else:
            tile_n = 128
        tile_n = min(tile_n, _round_up(n_total, 128))
    assert tile_n % 128 == 0, "tile_n must be a multiple of 128"

    n_pad = _round_up(n_total, tile_n)

    # Fold sigma = std**2 and the cross-term factor 2 into the features:
    #   g = sqrt(2)/std * f,
    #   -||f_i - f_j||^2 / sigma = -0.5||g_i||^2 - 0.5||g_j||^2 + g_i.g_j
    f = jnp.concatenate([fa, fb], axis=0)
    g = f * jnp.asarray(math.sqrt(2.0) / float(std), dtype=f.dtype)
    nsq = -0.5 * jnp.sum(jnp.square(g.astype(jnp.float32)), axis=1)
    nsq = jnp.pad(nsq, (0, n_pad - n_total))

    g_pad = jnp.pad(g, ((0, n_pad - n_total), (0, d_pad - d)))
    if use_bf16_inputs:
        g_pad = g_pad.astype(jnp.bfloat16)
    g_colT = jnp.transpose(g_pad)               # (Dp, Np): one-time pre-transposed copy

    # Signed MMD weights; padded rows get weight 0 and never contribute.
    w = jnp.concatenate([
        jnp.full((na,), 1.0 / na, dtype=jnp.float32),
        jnp.full((nb,), -1.0 / nb, dtype=jnp.float32)])
    w = jnp.pad(w, (0, n_pad - n_total))

    nsq_row = nsq.reshape(n_pad, 1)             # sublane-broadcast layout for rows
    w_row_lane = w.reshape(1, n_pad)            # lane layout for the (1,T)@(T,T) MXU reduce
    col_packed = jnp.stack([nsq, w], axis=0)    # (2, Np): single small DMA per step

    # Upper-triangular (row, col) tile-pair schedule, row-major (row tile reused
    # between consecutive steps).  Split into two contiguous halves for the two
    # v7x TensorCores; odd pair counts get one dummy pair with scale 0.
    n_blocks = n_pad // tile_n
    rows_np, cols_np = np.triu_indices(n_blocks)
    n_pairs = int(rows_np.size)
    n_steps = max(1, (n_pairs + 1) // 2)
    pad_pairs = 2 * n_steps - n_pairs
    scale_np = np.where(rows_np == cols_np, 1, 2).astype(np.int32)
    rows_all = np.concatenate([rows_np, np.zeros(pad_pairs, rows_np.dtype)]).astype(np.int32)
    cols_all = np.concatenate([cols_np, np.zeros(pad_pairs, cols_np.dtype)]).astype(np.int32)
    scale_all = np.concatenate([scale_np, np.zeros(pad_pairs, np.int32)]).astype(np.int32)

    rows = jnp.asarray(rows_all)
    cols = jnp.asarray(cols_all)
    scale = jnp.asarray(scale_all)

    def _pair(core, step):
        return core * n_steps + step

    grid_spec = pltpu.PrefetchScalarGridSpec(
        num_scalar_prefetch=3,
        grid=(2, n_steps),
        in_specs=[
            pl.BlockSpec((tile_n, d_pad), lambda c, s, r, cc, sc: (r[_pair(c, s)], 0)),
            pl.BlockSpec((d_pad, tile_n), lambda c, s, r, cc, sc: (0, cc[_pair(c, s)])),
            pl.BlockSpec((tile_n, 1),     lambda c, s, r, cc, sc: (r[_pair(c, s)], 0)),
            pl.BlockSpec((1, tile_n),     lambda c, s, r, cc, sc: (0, r[_pair(c, s)])),
            pl.BlockSpec((2, tile_n),     lambda c, s, r, cc, sc: (0, cc[_pair(c, s)])),
        ],
        out_specs=pl.BlockSpec((None, 1, tile_n), lambda c, s, r, cc, sc: (c, 0, 0)),
    )

    # Explicit VMEM budget: double-buffered input tiles + small side blocks +
    # (T,T) elementwise temporaries, with headroom, capped at v7x's 64 MiB.
    in_itemsize = jnp.dtype(g_pad.dtype).itemsize
    vmem_est = (2 * 2 * tile_n * d_pad * in_itemsize     # row + col tiles, double-buffered
                + 2 * tile_n * 128 * 4                   # (T,1) nsq_row blocks (lane-padded)
                + 3 * 2 * 8 * tile_n * 4                 # w_row / packed-col / out blocks
                + 4 * tile_n * tile_n * 4)               # xy / arg / e temporaries
    vmem_limit = int(min(max(vmem_est * 5 // 4, 32 * 1024 * 1024), 64 * 1024 * 1024))

    total_tiles = 2 * n_steps
    cost = pl.CostEstimate(
        flops=2 * total_tiles * tile_n * tile_n * (d_pad + 1),
        transcendentals=total_tiles * tile_n * tile_n,
        bytes_accessed=int(total_tiles * 2 * tile_n * d_pad * in_itemsize
                           + total_tiles * 12 * tile_n * 4),
    )

    kernel = functools.partial(_mmd_tile_kernel,
                               bf16_exp=use_bf16_exp,
                               clamp_nonpositive=clamp_nonpositive)

    partial_sums = pl.pallas_call(
        kernel,
        out_shape=jax.ShapeDtypeStruct((2, 1, tile_n), jnp.float32),
        grid_spec=grid_spec,
        compiler_params=pltpu.CompilerParams(
            dimension_semantics=("parallel", "arbitrary"),
            vmem_limit_bytes=vmem_limit),
        cost_estimate=cost,
    )(rows, cols, scale, g_pad, g_colT, nsq_row, w_row_lane, col_packed)

    return jnp.sum(partial_sums)


def _reference(fa, fb, std=1.0):
    """Pure-JAX reference, literal transcription of the PyTorch forward."""
    sigma = float(std) ** 2

    def pm(x, y):
        dlt = x[:, None, :] - y[None, :, :]
        d2 = jnp.sum(dlt * dlt, axis=2)
        return jnp.mean(jnp.exp(-d2 / sigma))

    return pm(fa, fa) + pm(fb, fb) - 2.0 * pm(fa, fb)


if __name__ == "__main__":
    key = jax.random.PRNGKey(0)
    ka, kb, kc, kd, ke, kf = jax.random.split(key, 6)

    # Small case consistent with the module usage (feature vectors (N, D)).
    fa = jax.random.normal(ka, (8, 32), dtype=jnp.float32)
    fb = jax.random.normal(kb, (8, 32), dtype=jnp.float32) + 0.5
    loss = jax.block_until_ready(gaussian_kernel_function(fa, fb, std=2.0))
    ref = _reference(fa, fb, std=2.0)
    assert jnp.allclose(loss, ref, atol=1e-5, rtol=1e-5), (loss, ref)

    # Multi-tile upper-triangular grid + padded rows + a dummy (scale-0) pair.
    fa2 = jax.random.normal(kc, (96, 24), dtype=jnp.float32)
    fb2 = jax.random.normal(kd, (80, 24), dtype=jnp.float32) + 0.25
    loss2 = jax.block_until_ready(
        gaussian_kernel_function(fa2, fb2, std=1.5, tile_n=128))
    ref2 = _reference(fa2, fb2, std=1.5)
    assert jnp.allclose(loss2, ref2, atol=1e-5, rtol=1e-5), (loss2, ref2)

    # Larger pair count: exercises the 2-way core split with multiple steps/core.
    fa3 = jax.random.normal(ke, (200, 16), dtype=jnp.float32)
    fb3 = jax.random.normal(kf, (136, 16), dtype=jnp.float32) + 0.1
    loss3 = jax.block_until_ready(
        gaussian_kernel_function(fa3, fb3, std=1.0, tile_n=128))
    ref3 = _reference(fa3, fb3, std=1.0)
    assert jnp.allclose(loss3, ref3, atol=1e-5, rtol=1e-5), (loss3, ref3)

    print("KERNEL_OK")
</pallas_src>

<mosaic_0001>
module attributes {stable_mosaic.version = 11 : i64} {
  func.func @_mmd_tile_kernel(%arg0: i32, %arg1: i32, %arg2: memref<2xi32, #tpu.memory_space<smem>>, %arg3: memref<2xi32, #tpu.memory_space<smem>>, %arg4: memref<2xi32, #tpu.memory_space<smem>>, %arg5: memref<128x128xf32, #tpu.memory_space<vmem>>, %arg6: memref<128x128xf32, #tpu.memory_space<vmem>>, %arg7: memref<128x1xf32, #tpu.memory_space<vmem>>, %arg8: memref<1x128xf32, #tpu.memory_space<vmem>>, %arg9: memref<2x128xf32, #tpu.memory_space<vmem>>, %arg10: memref<1x1x128xf32, #tpu.memory_space<vmem>>) attributes {dimension_semantics = [#tpu.dimension_semantics<parallel>, #tpu.dimension_semantics<arbitrary>], iteration_bounds = array<i64: 2, 1>, scalar_prefetch = 3 : i64, scratch_operands = 0 : i64, tpu.core_type = #tpu.core_type<tc>, window_params = [{transform_indices = @transform_0, window_bounds = array<i64: 128, 128>}, {transform_indices = @transform_1, window_bounds = array<i64: 128, 128>}, {transform_indices = @transform_2, window_bounds = array<i64: 128, 1>}, {transform_indices = @transform_3, window_bounds = array<i64: 1, 128>}, {transform_indices = @transform_4, window_bounds = array<i64: 2, 128>}, {transform_indices = @transform_5, window_bounds = array<i64: 1, 1, 128>}]} {
    %c0_i32 = arith.constant 0 : i32
    %0 = arith.cmpi eq, %arg1, %c0_i32 : i32
    %1 = arith.extui %0 : i1 to i32
    %c0_i32_0 = arith.constant 0 : i32
    %2 = arith.cmpi ne, %1, %c0_i32_0 : i32
    scf.if %2 {
      %cst_19 = arith.constant 0.000000e+00 : f32
      %32 = vector.broadcast %cst_19 : f32 to vector<1x128xf32>
      %c0_20 = arith.constant 0 : index
      %c0_21 = arith.constant 0 : index
      %c0_22 = arith.constant 0 : index
      %33 = vector.load %arg10[%c0_20, %c0_21, %c0_22] : memref<1x1x128xf32, #tpu.memory_space<vmem>>, vector<1x1x128xf32>
      %34 = vector.shape_cast %33 : vector<1x1x128xf32> to vector<1x128xf32>
      %35 = vector.shape_cast %32 : vector<1x128xf32> to vector<1x1x128xf32>
      tpu.vector_store %arg10[%c0_20, %c0_21, %c0_22], %35 {strides = array<i32>} : memref<1x1x128xf32, #tpu.memory_space<vmem>>, vector<1x1x128xf32>,
    } else {
    }
    %c0 = arith.constant 0 : index
    %c0_1 = arith.constant 0 : index
    %3 = vector.load %arg5[%c0, %c0_1] : memref<128x128xf32, #tpu.memory_space<vmem>>, vector<128x128xf32>
    %c0_2 = arith.constant 0 : index
    %c0_3 = arith.constant 0 : index
    %4 = vector.load %arg6[%c0_2, %c0_3] : memref<128x128xf32, #tpu.memory_space<vmem>>, vector<128x128xf32>
    %cst = arith.constant dense<0.000000e+00> : vector<128x128xf32>
    %5 = tpu.matmul %3, %4, %cst {dimension_numbers = #tpu.dot_dimension_numbers<[1], [0], [0], [1], [0, 0, 1, 1], [], []>} : vector<128x128xf32>, vector<128x128xf32>, vector<128x128xf32> -> vector<128x128xf32>
    %c0_4 = arith.constant 0 : index
    %c0_5 = arith.constant 0 : index
    %6 = vector.load %arg7[%c0_4, %c0_5] : memref<128x1xf32, #tpu.memory_space<vmem>>, vector<128x1xf32>
    %c0_6 = arith.constant 0 : index
    %c0_7 = arith.constant 0 : index
    %7 = vector.load %arg9[%c0_6, %c0_7] : memref<2x128xf32, #tpu.memory_space<vmem>>, vector<1x128xf32>
    %8 = vector.broadcast %6 : vector<128x1xf32> to vector<128x128xf32>
    %9 = vector.broadcast %7 : vector<1x128xf32> to vector<128x128xf32>
    %10 = arith.addf %8, %9 : vector<128x128xf32>
    %11 = arith.addf %10, %5 : vector<128x128xf32>
    %cst_8 = arith.constant 0.000000e+00 : f32
    %12 = vector.broadcast %cst_8 : f32 to vector<128x128xf32>
    %13 = arith.minimumf %11, %12 : vector<128x128xf32>
    %14 = math.exp %13 : vector<128x128xf32>
    %c0_9 = arith.constant 0 : index
    %c0_10 = arith.constant 0 : index
    %15 = vector.load %arg8[%c0_9, %c0_10] : memref<1x128xf32, #tpu.memory_space<vmem>>, vector<1x128xf32>
    %cst_11 = arith.constant dense<0.000000e+00> : vector<1x128xf32>
    %16 = tpu.matmul %15, %14, %cst_11 {dimension_numbers = #tpu.dot_dimension_numbers<[1], [0], [0], [1], [0, 0, 1, 1], [], []>} : vector<1x128xf32>, vector<128x128xf32>, vector<1x128xf32> -> vector<1x128xf32>
    %c1_i32 = arith.constant 1 : i32
    %17 = arith.muli %arg0, %c1_i32 : i32
    %18 = arith.addi %17, %arg1 : i32
    %19 = arith.index_cast %18 : i32 to index
    %20 = memref.load %arg4[%19] : memref<2xi32, #tpu.memory_space<smem>>
    %21 = arith.sitofp %20 : i32 to f32
    %c0_12 = arith.constant 0 : index
    %c0_13 = arith.constant 0 : index
    %c0_14 = arith.constant 0 : index
    %22 = vector.load %arg10[%c0_12, %c0_13, %c0_14] : memref<1x1x128xf32, #tpu.memory_space<vmem>>, vector<1x1x128xf32>
    %23 = vector.shape_cast %22 : vector<1x1x128xf32> to vector<1x128xf32>
    %c1 = arith.constant 1 : index
    %c0_15 = arith.constant 0 : index
    %24 = vector.load %arg9[%c1, %c0_15] : memref<2x128xf32, #tpu.memory_space<vmem>>, vector<1x128xf32>
    %25 = vector.broadcast %21 : f32 to vector<1x128xf32>
    %26 = arith.mulf %25, %24 : vector<1x128xf32>
    %27 = arith.mulf %26, %16 : vector<1x128xf32>
    %28 = arith.addf %23, %27 : vector<1x128xf32>
    %c0_16 = arith.constant 0 : index
    %c0_17 = arith.constant 0 : index
    %c0_18 = arith.constant 0 : index
    %29 = vector.load %arg10[%c0_16, %c0_17, %c0_18] : memref<1x1x128xf32, #tpu.memory_space<vmem>>, vector<1x1x128xf32>
    %30 = vector.shape_cast %29 : vector<1x1x128xf32> to vector<1x128xf32>
    %31 = vector.shape_cast %28 : vector<1x128xf32> to vector<1x1x128xf32>
    tpu.vector_store %arg10[%c0_16, %c0_17, %c0_18], %31 {strides = array<i32>} : memref<1x1x128xf32, #tpu.memory_space<vmem>>, vector<1x1x128xf32>,
    return
  }
  func.func @transform_0(%arg0: i32, %arg1: i32, %arg2: memref<2xi32, #tpu.memory_space<smem>>, %arg3: memref<2xi32, #tpu.memory_space<smem>>, %arg4: memref<2xi32, #tpu.memory_space<smem>>) -> (i32, i32) {
    %c1_i32 = arith.constant 1 : i32
    %0 = arith.muli %arg0, %c1_i32 : i32
    %1 = arith.addi %0, %arg1 : i32
    %2 = arith.index_cast %1 : i32 to index
    %3 = memref.load %arg2[%2] : memref<2xi32, #tpu.memory_space<smem>>
    %c0_i32 = arith.constant 0 : i32
    %c0_i32_0 = arith.constant 0 : i32
    return %3, %c0_i32 : i32, i32
  }
  func.func @transform_1(%arg0: i32, %arg1: i32, %arg2: memref<2xi32, #tpu.memory_space<smem>>, %arg3: memref<2xi32, #tpu.memory_space<smem>>, %arg4: memref<2xi32, #tpu.memory_space<smem>>) -> (i32, i32) {
    %c1_i32 = arith.constant 1 : i32
    %0 = arith.muli %arg0, %c1_i32 : i32
    %1 = arith.addi %0, %arg1 : i32
    %2 = arith.index_cast %1 : i32 to index
    %3 = memref.load %arg3[%2] : memref<2xi32, #tpu.memory_space<smem>>
    %c0_i32 = arith.constant 0 : i32
    %c0_i32_0 = arith.constant 0 : i32
    return %c0_i32, %3 : i32, i32
  }
  func.func @transform_2(%arg0: i32, %arg1: i32, %arg2: memref<2xi32, #tpu.memory_space<smem>>, %arg3: memref<2xi32, #tpu.memory_space<smem>>, %arg4: memref<2xi32, #tpu.memory_space<smem>>) -> (i32, i32) {
    %c1_i32 = arith.constant 1 : i32
    %0 = arith.muli %arg0, %c1_i32 : i32
    %1 = arith.addi %0, %arg1 : i32
    %2 = arith.index_cast %1 : i32 to index
    %3 = memref.load %arg2[%2] : memref<2xi32, #tpu.memory_space<smem>>
    %c0_i32 = arith.constant 0 : i32
    %c0_i32_0 = arith.constant 0 : i32
    return %3, %c0_i32 : i32, i32
  }
  func.func @transform_3(%arg0: i32, %arg1: i32, %arg2: memref<2xi32, #tpu.memory_space<smem>>, %arg3: memref<2xi32, #tpu.memory_space<smem>>, %arg4: memref<2xi32, #tpu.memory_space<smem>>) -> (i32, i32) {
    %c1_i32 = arith.constant 1 : i32
    %0 = arith.muli %arg0, %c1_i32 : i32
    %1 = arith.addi %0, %arg1 : i32
    %2 = arith.index_cast %1 : i32 to index
    %3 = memref.load %arg2[%2] : memref<2xi32, #tpu.memory_space<smem>>
    %c0_i32 = arith.constant 0 : i32
    %c0_i32_0 = arith.constant 0 : i32
    return %c0_i32, %3 : i32, i32
  }
  func.func @transform_4(%arg0: i32, %arg1: i32, %arg2: memref<2xi32, #tpu.memory_space<smem>>, %arg3: memref<2xi32, #tpu.memory_space<smem>>, %arg4: memref<2xi32, #tpu.memory_space<smem>>) -> (i32, i32) {
    %c1_i32 = arith.constant 1 : i32
    %0 = arith.muli %arg0, %c1_i32 : i32
    %1 = arith.addi %0, %arg1 : i32
    %2 = arith.index_cast %1 : i32 to index
    %3 = memref.load %arg3[%2] : memref<2xi32, #tpu.memory_space<smem>>
    %c0_i32 = arith.constant 0 : i32
    %c0_i32_0 = arith.constant 0 : i32
    return %c0_i32, %3 : i32, i32
  }
  func.func @transform_5(%arg0: i32, %arg1: i32, %arg2: memref<2xi32, #tpu.memory_space<smem>>, %arg3: memref<2xi32, #tpu.memory_space<smem>>, %arg4: memref<2xi32, #tpu.memory_space<smem>>) -> (i32, i32, i32) {
    %c0_i32 = arith.constant 0 : i32
    %c0_i32_0 = arith.constant 0 : i32
    %c0_i32_1 = arith.constant 0 : i32
    return %arg0, %c0_i32, %c0_i32_0 : i32, i32, i32
  }
}

</mosaic_0001>

<llo_original>
// kernel: tpu_custom_call.1
$region0: #{tpu_custom_call.1}
  #allocation0 [shape = 'u32[]', space=smem, size = 0x4, offset = 0x4, fixed_abs, tag = 'smem constant byte address 0x4 - core index']
  #allocation1 [shape = 'u32[72,128]{1,0:T(1,128)}', space=vmem, size = 0x9000, scoped, tag = 'internal scratch']
  #allocation2 [shape = 's32[1]{0}', space=sflag, size = 0x4, scoped, tag = 'scoped memory for tpu_custom_call.1']
  #allocation3 [shape = 'u8[512]{0}', space=smem, size = 0x200, scoped, tag = 'prefetched SMEM operand 0']
  #allocation4 [shape = 'u8[512]{0}', space=smem, size = 0x200, scoped, tag = 'prefetched SMEM operand 1']
  #allocation5 [shape = 'u8[512]{0}', space=smem, size = 0x200, scoped, tag = 'prefetched SMEM operand 2']
  %s0 = inlined_call_operand.vmem [shape: s32[2], index: 0, kind: input, shape index: {}]
  %s1 = inlined_call_operand.hbm [shape: s32[2], index: 1, kind: input, shape index: {}]
  %s2 = inlined_call_operand.hbm [shape: s32[2], index: 2, kind: input, shape index: {}]
  %s3 = inlined_call_operand.vmem [shape: f32[128,128], index: 3, kind: input, shape index: {}]
  %s4 = inlined_call_operand.hbm [shape: f32[128,128], index: 4, kind: input, shape index: {}]
  %s5 = inlined_call_operand.vmem [shape: f32[128,1], index: 5, kind: input, shape index: {}]
  %s6 = inlined_call_operand.vmem [shape: f32[1,128], index: 6, kind: input, shape index: {}]
  %s7 = inlined_call_operand.vmem [shape: f32[2,128], index: 7, kind: input, shape index: {}]
  %s8 = inlined_call_operand.hbm [shape: f32[2,1,128], index: 8, kind: output, shape index: {}]
  %s9 = sld [smem:[#allocation0]]
  $region61: #{tpu_custom_call.1} parent=0
    _
  %s11 = ssub.s32 1, %s9
  %s12 = scalar_select 0, %s11, %s9
  %s14 = sshll.u32 %s0, 4
  %s15 = int_to_ptr.vmem [resolvable:$true] %s14
  %17 = dma.vmem_to_smem %s15, 16, [#allocation3], [#allocation2]
  %s19 = sshll.u32 %s1, 4
  %s20 = int_to_ptr.hbm [resolvable:$true] %s19
  %22 = dma.hbm_to_smem %s20, 16, [#allocation4], [#allocation2]
  %s24 = sshll.u32 %s2, 4
  %s25 = int_to_ptr.hbm [resolvable:$true] %s24
  %27 = dma.hbm_to_smem %s25, 16, [#allocation5], [#allocation2]
  %29 = dma.done [#allocation2], 48
  %30 = sfence
  $region1: #{tpu_custom_call.1} parent=0
    #allocation6 [shape = 'u8[131072]{0}', space=vmem, size = 0x20000, scoped, tag = 'input window, operand 4']
    #allocation7 [shape = 's32[2]{0}', space=sflag, size = 0x8, scoped, tag = 'scoped memory for tpu_custom_call.1']
    #allocation8 [shape = 's32[2]{0}', space=sflag, size = 0x8, scoped, tag = 'scoped memory for tpu_custom_call.1']
    #allocation9 [shape = 'u8[1024]{0}', space=vmem, size = 0x400, scoped, tag = 'output window, operand 0']
    %31 = vsyncpa [#allocation7], 0
    %s32 = scalar_lea.sflag [#allocation7], 1
    %33 = vsyncpa %s32, 0
    %34 = vsyncpa [#allocation8], 0
    %s35 = scalar_lea.sflag [#allocation8], 1
    %36 = vsyncpa %s35, 0
    loop: start=0, step=1, limit=4
    $region2: #{tpu_custom_call.1} parent=1 // loop_pre_header
      _
    $region3: #{tpu_custom_call.1} parent=1 // loop_header
      %s38 = sphi 0, %s42
      %p39 = scmp.ge.s32.totalorder %s38, 4
      %s45 = sphi 0, %s57
      %s46 = sphi 0, %s53
      %s47 = sphi 0, %s45
      %s48 = sphi 0, %s46
      %s49 = sphi 0, %s47
      %s50 = sphi 0, %s48
      %s64 = sphi 0, %s66
      %s67 = sphi 0, %s64
      %s68 = sphi 0, %s67
      %s84 = sphi 0, %s68
      %s94 = sphi 0, %s96
      %s97 = sphi 0, %s94
      %s98 = sphi 0, %s97
      %s114 = sphi 0, %s98
      %s124 = sphi 0, %s126
      %s127 = sphi 0, %s124
      %s128 = sphi 0, %s127
      %s144 = sphi 0, %s128
      %s154 = sphi 0, %s156
      %s157 = sphi 0, %s154
      %s158 = sphi 0, %s157
      %s174 = sphi 0, %s158
      %s184 = sphi 0, %s186
      %s187 = sphi 0, %s184
      %s188 = sphi 0, %s187
      %s204 = sphi 0, %s188
      %s210 = sphi 0, %s212
      %s213 = sphi 0, %s210
      %s214 = sphi 0, %s213
      %s230 = sphi 0, %s214
    $region4: #{tpu_custom_call.1} parent=1 // loop_header_branch
      %41 = sbr.rel (%p39) target = $region8
    $region5: #{tpu_custom_call.1} parent=1 // loop_body
      %s43 = ssub.s32 %s38, 1
      %s44 = ssub.s32 %s38, 2
      %s51 = sadd.s32 1, %s46
      %p52 = scmp.ge.s32.totalorder %s51, 1
      %s53 = scalar_select %p52, 0, %s51
      %s54 = sadd.s32 1, %s45
      %s55 = scalar_select %p52, %s54, %s45
      %p56 = scmp.ge.s32.totalorder %s55, 2
      %s57 = scalar_select %p56, 0, %s55
      %s58 = sadd.s32 %s45, %s46
      %s59 = sld [smem:[#allocation3 + %s58]]
      %s60 = sadd.s32 %s57, %s53
      %s61 = sld [smem:[#allocation3 + %s60]]
      %s62 = ssub.s32 %s59, %s61
      %p63 = scmp.eq.s32.totalorder %s62, 0
      %s65 = sadd.s32 %s64, 1
      %s66 = scalar_select %p63, %s64, %s65
      %p69 = pneg %p63
      %p70 = scmp.eq.s32.totalorder %s38, 1
      %p71 = por %p69, %p70
      %p72 = scmp.ne.s32.totalorder %s64, %s67
      %p73 = scmp.eq.s32.totalorder %s38, 0
      %p74 = por %p72, %p73
      %p75 = scmp.ne.s32.totalorder %s64, %s67
      %p76 = scmp.eq.s32.totalorder %s43, 1
      %p77 = por %p75, %p76
      %p78 = scmp.ne.s32.totalorder %s67, %s68
      %p79 = scmp.eq.s32.totalorder %s43, 0
      %p80 = por %p78, %p79
      %p81 = scmp.ne.s32.totalorder %s67, %s68
      %p82 = scmp.eq.s32.totalorder %s44, 1
      %p83 = por %p81, %p82
      %p85 = scmp.ne.s32.totalorder %s68, %s84
      %p86 = scmp.eq.s32.totalorder %s44, 0
      %p87 = por %p85, %p86
      %s88 = sadd.s32 %s45, %s46
      %s89 = sld [smem:[#allocation4 + %s88]]
      %s90 = sadd.s32 %s57, %s53
      %s91 = sld [smem:[#allocation4 + %s90]]
      %s92 = ssub.s32 %s89, %s91
      %p93 = scmp.eq.s32.totalorder %s92, 0
      %s95 = sadd.s32 %s94, 1
      %s96 = scalar_select %p93, %s94, %s95
      %p99 = pneg %p93
      %p100 = scmp.eq.s32.totalorder %s38, 1
      %p101 = por %p99, %p100
      %p102 = scmp.ne.s32.totalorder %s94, %s97
      %p103 = scmp.eq.s32.totalorder %s38, 0
      %p104 = por %p102, %p103
      %p105 = scmp.ne.s32.totalorder %s94, %s97
      %p106 = scmp.eq.s32.totalorder %s43, 1
      %p107 = por %p105, %p106
      %p108 = scmp.ne.s32.totalorder %s97, %s98
      %p109 = scmp.eq.s32.totalorder %s43, 0
      %p110 = por %p108, %p109
      %p111 = scmp.ne.s32.totalorder %s97, %s98
      %p112 = scmp.eq.s32.totalorder %s44, 1
      %p113 = por %p111, %p112
      %p115 = scmp.ne.s32.totalorder %s98, %s114
      %p116 = scmp.eq.s32.totalorder %s44, 0
      %p117 = por %p115, %p116
      %s118 = sadd.s32 %s45, %s46
      %s119 = sld [smem:[#allocation3 + %s118]]
      %s120 = sadd.s32 %s57, %s53
      %s121 = sld [smem:[#allocation3 + %s120]]
      %s122 = ssub.s32 %s119, %s121
      %p123 = scmp.eq.s32.totalorder %s122, 0
      %s125 = sadd.s32 %s124, 1
      %s126 = scalar_select %p123, %s124, %s125
      %p129 = pneg %p123
      %p130 = scmp.eq.s32.totalorder %s38, 1
      %p131 = por %p129, %p130
      %p132 = scmp.ne.s32.totalorder %s124, %s127
      %p133 = scmp.eq.s32.totalorder %s38, 0
      %p134 = por %p132, %p133
      %p135 = scmp.ne.s32.totalorder %s124, %s127
      %p136 = scmp.eq.s32.totalorder %s43, 1
      %p137 = por %p135, %p136
      %p138 = scmp.ne.s32.totalorder %s127, %s128
      %p139 = scmp.eq.s32.totalorder %s43, 0
      %p140 = por %p138, %p139
      %p141 = scmp.ne.s32.totalorder %s127, %s128
      %p142 = scmp.eq.s32.totalorder %s44, 1
      %p143 = por %p141, %p142
      %p145 = scmp.ne.s32.totalorder %s128, %s144
      %p146 = scmp.eq.s32.totalorder %s44, 0
      %p147 = por %p145, %p146
      %s148 = sadd.s32 %s45, %s46
      %s149 = sld [smem:[#allocation3 + %s148]]
      %s150 = sadd.s32 %s57, %s53
      %s151 = sld [smem:[#allocation3 + %s150]]
      %s152 = ssub.s32 %s149, %s151
      %p153 = scmp.eq.s32.totalorder %s152, 0
      %s155 = sadd.s32 %s154, 1
      %s156 = scalar_select %p153, %s154, %s155
      %p159 = pneg %p153
      %p160 = scmp.eq.s32.totalorder %s38, 1
      %p161 = por %p159, %p160
      %p162 = scmp.ne.s32.totalorder %s154, %s157
      %p163 = scmp.eq.s32.totalorder %s38, 0
      %p164 = por %p162, %p163
      %p165 = scmp.ne.s32.totalorder %s154, %s157
      %p166 = scmp.eq.s32.totalorder %s43, 1
      %p167 = por %p165, %p166
      %p168 = scmp.ne.s32.totalorder %s157, %s158
      %p169 = scmp.eq.s32.totalorder %s43, 0
      %p170 = por %p168, %p169
      %p171 = scmp.ne.s32.totalorder %s157, %s158
      %p172 = scmp.eq.s32.totalorder %s44, 1
      %p173 = por %p171, %p172
      %p175 = scmp.ne.s32.totalorder %s158, %s174
      %p176 = scmp.eq.s32.totalorder %s44, 0
      %p177 = por %p175, %p176
      %s178 = sadd.s32 %s45, %s46
      %s179 = sld [smem:[#allocation4 + %s178]]
      %s180 = sadd.s32 %s57, %s53
      %s181 = sld [smem:[#allocation4 + %s180]]
      %s182 = ssub.s32 %s179, %s181
      %p183 = scmp.eq.s32.totalorder %s182, 0
      %s185 = sadd.s32 %s184, 1
      %s186 = scalar_select %p183, %s184, %s185
      %p189 = pneg %p183
      %p190 = scmp.eq.s32.totalorder %s38, 1
      %p191 = por %p189, %p190
      %p192 = scmp.ne.s32.totalorder %s184, %s187
      %p193 = scmp.eq.s32.totalorder %s38, 0
      %p194 = por %p192, %p193
      %p195 = scmp.ne.s32.totalorder %s184, %s187
      %p196 = scmp.eq.s32.totalorder %s43, 1
      %p197 = por %p195, %p196
      %p198 = scmp.ne.s32.totalorder %s187, %s188
      %p199 = scmp.eq.s32.totalorder %s43, 0
      %p200 = por %p198, %p199
      %p201 = scmp.ne.s32.totalorder %s187, %s188
      %p202 = scmp.eq.s32.totalorder %s44, 1
      %p203 = por %p201, %p202
      %p205 = scmp.ne.s32.totalorder %s188, %s204
      %p206 = scmp.eq.s32.totalorder %s44, 0
      %p207 = por %p205, %p206
      %s208 = ssub.s32 %s45, %s57
      %p209 = scmp.eq.s32.totalorder %s208, 0
      %s211 = sadd.s32 %s210, 1
      %s212 = scalar_select %p209, %s210, %s211
      %p215 = pneg %p209
      %p216 = scmp.eq.s32.totalorder %s38, 1
      %p217 = por %p215, %p216
      %p218 = scmp.ne.s32.totalorder %s210, %s213
      %p219 = scmp.eq.s32.totalorder %s38, 0
      %p220 = por %p218, %p219
      %p221 = scmp.ne.s32.totalorder %s210, %s213
      %p222 = scmp.eq.s32.totalorder %s43, 1
      %p223 = por %p221, %p222
      %p224 = scmp.ne.s32.totalorder %s213, %s214
      %p225 = scmp.eq.s32.totalorder %s43, 0
      %p226 = por %p224, %p225
      %p227 = scmp.ne.s32.totalorder %s213, %s214
      %p228 = scmp.eq.s32.totalorder %s44, 1
      %p229 = por %p227, %p228
      %p231 = scmp.ne.s32.totalorder %s214, %s230
      %p232 = scmp.eq.s32.totalorder %s44, 0
      %p233 = por %p231, %p232
      %p234 = scmp.le.s32.totalorder 1, %s38
      %p235 = scmp.lt.s32.totalorder %s38, 3
      %p236 = pnand %p234, %p235
      %p237 = pneg %p236
      // Predicated region
      $region9: #{tpu_custom_call.1} parent=5 // pred_check
        _
      $region10: #{tpu_custom_call.1} parent=5 // pred_check_branch
        %239 = sbr.rel (%p236) target = $region12
      $region11: #{tpu_custom_call.1} parent=5 // pred_region
        %s240 = ssub.s32 %s38, 1
      $region12: #{tpu_custom_call.1} parent=5 // pred_fallthru
        _
      %p241 = scmp.lt.s32.totalorder %s38, 2
      // Predicated region
      $region13: #{tpu_custom_call.1} parent=5 // pred_check
        %p242 = pneg %p241
      $region14: #{tpu_custom_call.1} parent=5 // pred_check_branch
        %244 = sbr.rel (%p242) target = $region16
      $region15: #{tpu_custom_call.1} parent=5 // pred_region
        // Predicated region
        $region17: #{tpu_custom_call.1} parent=15 // pred_check
          %p245 = pneg %p74
        $region18: #{tpu_custom_call.1} parent=15 // pred_check_branch
          %247 = sbr.rel (%p245) target = $region20
        $region19: #{tpu_custom_call.1} parent=15 // pred_region
          %s248 = sadd.s32 %s45, %s46
          %s249 = sld [smem:[#allocation3 + %s248]]
          %s250 = smul.u32 16, %s249
          %p251 = scmp.lt.s32.totalorder %s250, 15
          %s252 = scalar_select %p251, %s250, 15
          %s253 = smul.addr %s252, 8
          %s254 = scalar_lea.vmem %s3, %s253
          %s255 = sadd.s32 %s45, %s46
          %s256 = sld [smem:[#allocation3 + %s255]]
          %s257 = smul.u32 16, %s256
        $region20: #{tpu_custom_call.1} parent=15 // pred_fallthru
          _
        // Predicated region
        $region21: #{tpu_custom_call.1} parent=15 // pred_check
          %p258 = pneg %p104
        $region22: #{tpu_custom_call.1} parent=15 // pred_check_branch
          %260 = sbr.rel (%p258) target = $region24
        $region23: #{tpu_custom_call.1} parent=15 // pred_region
          %s261 = sand.u32 %s94, 1
          %s262 = scalar_lea.sflag [#allocation7], %s261
          %s263 = sand.u32 %s94, 1
          %s264 = smul.addr %s263, 128
          %s265 = scalar_lea.vmem [#allocation6], %s264
          %s266 = sadd.s32 %s45, %s46
          %s267 = sld [smem:[#allocation4 + %s266]]
          %269 = vsyncadd %s262, 0
          %s270 = smul.addr %s267, 8
          %s271 = scalar_lea.hbm %s4, %s270
          %s272 = sshll.u32 %s271, 4
          %s273 = int_to_ptr.hbm [resolvable:$true] %s272
          %s274 = sshll.u32 %s265, 4
          %s275 = int_to_ptr.vmem [resolvable:$true] %s274
          %280 = dma.hbm_to_vmem [thread:$0]  %s273, 2048, %s275, %s262, 128, 128, 8
        $region24: #{tpu_custom_call.1} parent=15 // pred_fallthru
          _
        // Predicated region
        $region25: #{tpu_custom_call.1} parent=15 // pred_check
          %p281 = pneg %p134
        $region26: #{tpu_custom_call.1} parent=15 // pred_check_branch
          %283 = sbr.rel (%p281) target = $region28
        $region27: #{tpu_custom_call.1} parent=15 // pred_region
          %s284 = sadd.s32 %s45, %s46
          %s285 = sld [smem:[#allocation3 + %s284]]
          %s286 = smul.u32 16, %s285
          %p287 = scmp.lt.s32.totalorder %s286, 15
          %s288 = scalar_select %p287, %s286, 15
          %s289 = smul.addr %s288, 8
          %s290 = scalar_lea.vmem %s5, %s289
          %s291 = sadd.s32 %s45, %s46
          %s292 = sld [smem:[#allocation3 + %s291]]
          %s293 = smul.u32 16, %s292
        $region28: #{tpu_custom_call.1} parent=15 // pred_fallthru
          _
        // Predicated region
        $region29: #{tpu_custom_call.1} parent=15 // pred_check
          %p294 = pneg %p164
        $region30: #{tpu_custom_call.1} parent=15 // pred_check_branch
          %296 = sbr.rel (%p294) target = $region32
        $region31: #{tpu_custom_call.1} parent=15 // pred_region
          %s297 = sadd.s32 %s45, %s46
          %s298 = sld [smem:[#allocation3 + %s297]]
          %p299 = scmp.lt.s32.totalorder %s298, 0
          %s300 = scalar_select %p299, %s298, 0
          %s301 = scalar_lea.vmem %s6, %s300
          %s302 = sadd.s32 %s45, %s46
          %s303 = sld [smem:[#allocation3 + %s302]]
        $region32: #{tpu_custom_call.1} parent=15 // pred_fallthru
          _
        // Predicated region
        $region33: #{tpu_custom_call.1} parent=15 // pred_check
          %p304 = pneg %p194
        $region34: #{tpu_custom_call.1} parent=15 // pred_check_branch
          %306 = sbr.rel (%p304) target = $region36
        $region35: #{tpu_custom_call.1} parent=15 // pred_region
          %s307 = sadd.s32 %s45, %s46
          %s308 = sld [smem:[#allocation4 + %s307]]
          %p309 = scmp.lt.s32.totalorder %s308, 0
          %s310 = scalar_select %p309, %s308, 0
          %s311 = smul.addr %s310, 2
          %s312 = scalar_lea.vmem %s7, %s311
          %s313 = sadd.s32 %s45, %s46
          %s314 = sld [smem:[#allocation4 + %s313]]
        $region36: #{tpu_custom_call.1} parent=15 // pred_fallthru
          _
      $region16: #{tpu_custom_call.1} parent=5 // pred_fallthru
        _
      %p315 = scmp.le.s32.totalorder 1, %s38
      %p316 = scmp.lt.s32.totalorder %s38, 3
      %p317 = pnand %p315, %p316
      %p318 = pneg %p317
      // Predicated region
      $region37: #{tpu_custom_call.1} parent=5 // pred_check
        _
      $region38: #{tpu_custom_call.1} parent=5 // pred_check_branch
        %320 = sbr.rel (%p317) target = $region40
      $region39: #{tpu_custom_call.1} parent=5 // pred_region
        %s321 = ssub.s32 %s38, 1
        %s322 = sand.u32 %s97, 1
        %s323 = scalar_lea.sflag [#allocation7], %s322
        %s324 = sand.u32 %s97, 1
        %s325 = smul.addr %s324, 128
        %s326 = scalar_lea.vmem [#allocation6], %s325
        // Predicated region
        $region41: #{tpu_custom_call.1} parent=39 // pred_check
          %p327 = pneg %p110
        $region42: #{tpu_custom_call.1} parent=39 // pred_check_branch
          %329 = sbr.rel (%p327) target = $region44
        $region43: #{tpu_custom_call.1} parent=39 // pred_region
          %331 = dma.done %s323, 2048
        $region44: #{tpu_custom_call.1} parent=39 // pred_fallthru
          _
        %s332 = sadd.s32 %s47, %s48
        %s333 = sld [smem:[#allocation3 + %s332]]
        %s334 = smul.u32 16, %s333
        %p335 = scmp.lt.s32.totalorder %s334, 15
        %s336 = scalar_select %p335, %s334, 15
        %s337 = smul.addr %s336, 8
        %s338 = scalar_lea.vmem %s3, %s337
        %p339 = pneg %p80
        %p340 = pneg %p77
        %s341 = sand.u32 %s97, 1
        %s342 = scalar_lea.sflag [#allocation7], %s341
        %s343 = sand.u32 %s97, 1
        %s344 = smul.addr %s343, 128
        %s345 = scalar_lea.vmem [#allocation6], %s344
        %p346 = pneg %p110
        %p347 = pneg %p107
        %s348 = sadd.s32 %s47, %s48
        %s349 = sld [smem:[#allocation3 + %s348]]
        %s350 = smul.u32 16, %s349
        %p351 = scmp.lt.s32.totalorder %s350, 15
        %s352 = scalar_select %p351, %s350, 15
        %s353 = smul.addr %s352, 8
        %s354 = scalar_lea.vmem %s5, %s353
        %p355 = pneg %p140
        %p356 = pneg %p137
        %s357 = sadd.s32 %s47, %s48
        %s358 = sld [smem:[#allocation3 + %s357]]
        %p359 = scmp.lt.s32.totalorder %s358, 0
        %s360 = scalar_select %p359, %s358, 0
        %s361 = scalar_lea.vmem %s6, %s360
        %p362 = pneg %p170
        %p363 = pneg %p167
        %s364 = sadd.s32 %s47, %s48
        %s365 = sld [smem:[#allocation4 + %s364]]
        %p366 = scmp.lt.s32.totalorder %s365, 0
        %s367 = scalar_select %p366, %s365, 0
        %s368 = smul.addr %s367, 2
        %s369 = scalar_lea.vmem %s7, %s368
        %p370 = pneg %p200
        %p371 = pneg %p197
        %p372 = pneg %p226
        %p373 = pneg %p223
        %s374 = sand.u32 %s213, 1
        %s375 = scalar_lea.sflag [#allocation8], %s374
        %s376 = sand.u32 %s213, 1
        %s377 = scalar_lea.vmem [#allocation9], %s376
        %s378 = sadd.s32 %s47, %s48
        %s379 = sld [smem:[#allocation3 + %s378]]
        %s380 = smul.u32 16, %s379
        %p381 = scmp.lt.s32.totalorder %s380, 15
        %s382 = scalar_select %p381, %s380, 15
        %s383 = smul.addr %s382, 8
        %s384 = scalar_lea.vmem %s3, %s383
        %s385 = sadd.s32 %s47, %s48
        %s386 = sld [smem:[#allocation3 + %s385]]
        %s387 = smul.u32 16, %s386
        %s388 = sadd.s32 %s47, %s48
        %s389 = sld [smem:[#allocation4 + %s388]]
        %s390 = sadd.s32 %s47, %s48
        %s391 = sld [smem:[#allocation3 + %s390]]
        %s392 = smul.u32 16, %s391
        %p393 = scmp.lt.s32.totalorder %s392, 15
        %s394 = scalar_select %p393, %s392, 15
        %s395 = smul.addr %s394, 8
        %s396 = scalar_lea.vmem %s5, %s395
        %s397 = sadd.s32 %s47, %s48
        %s398 = sld [smem:[#allocation3 + %s397]]
        %s399 = smul.u32 16, %s398
        %s400 = sadd.s32 %s47, %s48
        %s401 = sld [smem:[#allocation3 + %s400]]
        %p402 = scmp.lt.s32.totalorder %s401, 0
        %s403 = scalar_select %p402, %s401, 0
        %s404 = scalar_lea.vmem %s6, %s403
        %s405 = sadd.s32 %s47, %s48
        %s406 = sld [smem:[#allocation3 + %s405]]
        %s407 = sadd.s32 %s47, %s48
        %s408 = sld [smem:[#allocation4 + %s407]]
        %p409 = scmp.lt.s32.totalorder %s408, 0
        %s410 = scalar_select %p409, %s408, 0
        %s411 = smul.addr %s410, 2
        %s412 = scalar_lea.vmem %s7, %s411
        %s413 = sadd.s32 %s47, %s48
        %s414 = sld [smem:[#allocation4 + %s413]]
        %p415 = scmp.eq.s32.totalorder %s48, 0
        // Predicated region
        $region45: #{tpu_custom_call.1} parent=39 // pred_check
          %p416 = pneg %p415
        $region46: #{tpu_custom_call.1} parent=39 // pred_check_branch
          %418 = sbr.rel (%p416) target = $region48
        $region47: #{tpu_custom_call.1} parent=39 // pred_region
          %419 = vst [vmem:[%s377] sm:$0x1] 0.0
        $region48: #{tpu_custom_call.1} parent=39 // pred_fallthru
          _
        %v420 = vld [vmem:[%s384] sm:$0xff]
        %v421 = vld [vmem:[%s384 + $0x8] sm:$0xff]
        %v422 = vld [vmem:[%s384 + $0x10] sm:$0xff]
        %v423 = vld [vmem:[%s384 + $0x18] sm:$0xff]
        %v424 = vld [vmem:[%s384 + $0x20] sm:$0xff]
        %v425 = vld [vmem:[%s384 + $0x28] sm:$0xff]
        %v426 = vld [vmem:[%s384 + $0x30] sm:$0xff]
        %v427 = vld [vmem:[%s384 + $0x38] sm:$0xff]
        %v428 = vld [vmem:[%s384 + $0x40] sm:$0xff]
        %v429 = vld [vmem:[%s384 + $0x48] sm:$0xff]
        %v430 = vld [vmem:[%s384 + $0x50] sm:$0xff]
        %v431 = vld [vmem:[%s384 + $0x58] sm:$0xff]
        %v432 = vld [vmem:[%s384 + $0x60] sm:$0xff]
        %v433 = vld [vmem:[%s384 + $0x68] sm:$0xff]
        %v434 = vld [vmem:[%s384 + $0x70] sm:$0xff]
        %v435 = vld [vmem:[%s384 + $0x78] sm:$0xff]
        %v436 = vld [vmem:[%s326] sm:$0xff]
        %v437 = vld [vmem:[%s326 + $0x8] sm:$0xff]
        %v438 = vld [vmem:[%s326 + $0x10] sm:$0xff]
        %v439 = vld [vmem:[%s326 + $0x18] sm:$0xff]
        %v440 = vld [vmem:[%s326 + $0x20] sm:$0xff]
        %v441 = vld [vmem:[%s326 + $0x28] sm:$0xff]
        %v442 = vld [vmem:[%s326 + $0x30] sm:$0xff]
        %v443 = vld [vmem:[%s326 + $0x38] sm:$0xff]
        %v444 = vld [vmem:[%s326 + $0x40] sm:$0xff]
        %v445 = vld [vmem:[%s326 + $0x48] sm:$0xff]
        %v446 = vld [vmem:[%s326 + $0x50] sm:$0xff]
        %v447 = vld [vmem:[%s326 + $0x58] sm:$0xff]
        %v448 = vld [vmem:[%s326 + $0x60] sm:$0xff]
        %v449 = vld [vmem:[%s326 + $0x68] sm:$0xff]
        %v450 = vld [vmem:[%s326 + $0x70] sm:$0xff]
        %v451 = vld [vmem:[%s326 + $0x78] sm:$0xff]
        %452 = vmatpush.msra.mxu0 %v451
        %453 = vmatpush.msra.mxu0 %v450
        %454 = vmatpush.msra.mxu0 %v449
        %455 = vmatpush.msra.mxu0 %v448
        %456 = vmatpush.msra.mxu0 %v447
        %457 = vmatpush.msra.mxu0 %v446
        %458 = vmatpush.msra.mxu0 %v445
        %459 = vmatpush.msra.mxu0 %v444
        %460 = vmatpush.msra.mxu0 %v443
        %461 = vmatpush.msra.mxu0 %v442
        %462 = vmatpush.msra.mxu0 %v441
        %463 = vmatpush.msra.mxu0 %v440
        %464 = vmatpush.msra.mxu0 %v439
        %465 = vmatpush.msra.mxu0 %v438
        %466 = vmatpush.msra.mxu0 %v437
        %467 = vmatpush.msra.mxu0 %v436
        %468 = vmatmul.f32.gmra.mxu0 %v420
        %v469 = vpop.f32.mrf.mxu0
        %v470 = vadd.f32 0.0, %v469
        %471 = vmatmul.f32.gmra.mxu0 %v421
        %v472 = vpop.f32.mrf.mxu0
        %v473 = vadd.f32 0.0, %v472
        %474 = vmatmul.f32.gmra.mxu0 %v422
        %v475 = vpop.f32.mrf.mxu0
        %v476 = vadd.f32 0.0, %v475
        %477 = vmatmul.f32.gmra.mxu0 %v423
        %v478 = vpop.f32.mrf.mxu0
        %v479 = vadd.f32 0.0, %v478
        %480 = vmatmul.f32.gmra.mxu0 %v424
        %v481 = vpop.f32.mrf.mxu0
        %v482 = vadd.f32 0.0, %v481
        %483 = vmatmul.f32.gmra.mxu0 %v425
        %v484 = vpop.f32.mrf.mxu0
        %v485 = vadd.f32 0.0, %v484
        %486 = vmatmul.f32.gmra.mxu0 %v426
        %v487 = vpop.f32.mrf.mxu0
        %v488 = vadd.f32 0.0, %v487
        %489 = vmatmul.f32.gmra.mxu0 %v427
        %v490 = vpop.f32.mrf.mxu0
        %v491 = vadd.f32 0.0, %v490
        %492 = vmatmul.f32.gmra.mxu0 %v428
        %v493 = vpop.f32.mrf.mxu0
        %v494 = vadd.f32 0.0, %v493
        %495 = vmatmul.f32.gmra.mxu0 %v429
        %v496 = vpop.f32.mrf.mxu0
        %v497 = vadd.f32 0.0, %v496
        %498 = vmatmul.f32.gmra.mxu0 %v430
        %v499 = vpop.f32.mrf.mxu0
        %v500 = vadd.f32 0.0, %v499
        %501 = vmatmul.f32.gmra.mxu0 %v431
        %v502 = vpop.f32.mrf.mxu0
        %v503 = vadd.f32 0.0, %v502
        %504 = vmatmul.f32.gmra.mxu0 %v432
        %v505 = vpop.f32.mrf.mxu0
        %v506 = vadd.f32 0.0, %v505
        %507 = vmatmul.f32.gmra.mxu0 %v433
        %v508 = vpop.f32.mrf.mxu0
        %v509 = vadd.f32 0.0, %v508
        %510 = vmatmul.f32.gmra.mxu0 %v434
        %v511 = vpop.f32.mrf.mxu0
        %v512 = vadd.f32 0.0, %v511
        %513 = vmatmul.f32.gmra.mxu0 %v435
        %v514 = vpop.f32.mrf.mxu0
        %v515 = vadd.f32 0.0, %v514
        %516 = vdwg.mxu0
        %v517 = vld [vmem:[%s396] sm:$0xff]
        %v518 = vld [vmem:[%s396 + $0x8] sm:$0xff]
        %v519 = vld [vmem:[%s396 + $0x10] sm:$0xff]
        %v520 = vld [vmem:[%s396 + $0x18] sm:$0xff]
        %v521 = vld [vmem:[%s396 + $0x20] sm:$0xff]
        %v522 = vld [vmem:[%s396 + $0x28] sm:$0xff]
        %v523 = vld [vmem:[%s396 + $0x30] sm:$0xff]
        %v524 = vld [vmem:[%s396 + $0x38] sm:$0xff]
        %v525 = vld [vmem:[%s396 + $0x40] sm:$0xff]
        %v526 = vld [vmem:[%s396 + $0x48] sm:$0xff]
        %v527 = vld [vmem:[%s396 + $0x50] sm:$0xff]
        %v528 = vld [vmem:[%s396 + $0x58] sm:$0xff]
        %v529 = vld [vmem:[%s396 + $0x60] sm:$0xff]
        %v530 = vld [vmem:[%s396 + $0x68] sm:$0xff]
        %v531 = vld [vmem:[%s396 + $0x70] sm:$0xff]
        %v532 = vld [vmem:[%s396 + $0x78] sm:$0xff]
        %v533 = vld [vmem:[%s412] sm:$0x1]
        %535 = vset.pattern.permute.xlu0 0
        %536 = vperm.xlu0 %535, %v517
        %v537 = vpop.permute.xlu0 %536
        %540 = vset.pattern.permute.xlu0 0
        %541 = vperm.xlu0 %540, %v518
        %v542 = vpop.permute.xlu0 %541
        %545 = vset.pattern.permute.xlu0 0
        %546 = vperm.xlu0 %545, %v519
        %v547 = vpop.permute.xlu0 %546
        %550 = vset.pattern.permute.xlu0 0
        %551 = vperm.xlu0 %550, %v520
        %v552 = vpop.permute.xlu0 %551
        %555 = vset.pattern.permute.xlu0 0
        %556 = vperm.xlu0 %555, %v521
        %v557 = vpop.permute.xlu0 %556
        %560 = vset.pattern.permute.xlu0 0
        %561 = vperm.xlu0 %560, %v522
        %v562 = vpop.permute.xlu0 %561
        %565 = vset.pattern.permute.xlu0 0
        %566 = vperm.xlu0 %565, %v523
        %v567 = vpop.permute.xlu0 %566
        %570 = vset.pattern.permute.xlu0 0
        %571 = vperm.xlu0 %570, %v524
        %v572 = vpop.permute.xlu0 %571
        %575 = vset.pattern.permute.xlu0 0
        %576 = vperm.xlu0 %575, %v525
        %v577 = vpop.permute.xlu0 %576
        %580 = vset.pattern.permute.xlu0 0
        %581 = vperm.xlu0 %580, %v526
        %v582 = vpop.permute.xlu0 %581
        %585 = vset.pattern.permute.xlu0 0
        %586 = vperm.xlu0 %585, %v527
        %v587 = vpop.permute.xlu0 %586
        %590 = vset.pattern.permute.xlu0 0
        %591 = vperm.xlu0 %590, %v528
        %v592 = vpop.permute.xlu0 %591
        %595 = vset.pattern.permute.xlu0 0
        %596 = vperm.xlu0 %595, %v529
        %v597 = vpop.permute.xlu0 %596
        %600 = vset.pattern.permute.xlu0 0
        %601 = vperm.xlu0 %600, %v530
        %v602 = vpop.permute.xlu0 %601
        %605 = vset.pattern.permute.xlu0 0
        %606 = vperm.xlu0 %605, %v531
        %v607 = vpop.permute.xlu0 %606
        %610 = vset.pattern.permute.xlu0 0
        %611 = vperm.xlu0 %610, %v532
        %v612 = vpop.permute.xlu0 %611
        %v614 = vperm.slane %v533, 0
        %v615 = vadd.f32 %v537, %v614
        %v616 = vadd.f32 %v542, %v614
        %v617 = vadd.f32 %v547, %v614
        %v618 = vadd.f32 %v552, %v614
        %v619 = vadd.f32 %v557, %v614
        %v620 = vadd.f32 %v562, %v614
        %v621 = vadd.f32 %v567, %v614
        %v622 = vadd.f32 %v572, %v614
        %v623 = vadd.f32 %v577, %v614
        %v624 = vadd.f32 %v582, %v614
        %v625 = vadd.f32 %v587, %v614
        %v626 = vadd.f32 %v592, %v614
        %v627 = vadd.f32 %v597, %v614
        %v628 = vadd.f32 %v602, %v614
        %v629 = vadd.f32 %v607, %v614
        %v630 = vadd.f32 %v612, %v614
        %v631 = vadd.f32 %v615, %v470
        %v632 = vadd.f32 %v616, %v473
        %v633 = vadd.f32 %v617, %v476
        %v634 = vadd.f32 %v618, %v479
        %v635 = vadd.f32 %v619, %v482
        %v636 = vadd.f32 %v620, %v485
        %v637 = vadd.f32 %v621, %v488
        %v638 = vadd.f32 %v622, %v491
        %v639 = vadd.f32 %v623, %v494
        %v640 = vadd.f32 %v624, %v497
        %v641 = vadd.f32 %v625, %v500
        %v642 = vadd.f32 %v626, %v503
        %v643 = vadd.f32 %v627, %v506
        %v644 = vadd.f32 %v628, %v509
        %v645 = vadd.f32 %v629, %v512
        %v646 = vadd.f32 %v630, %v515
        %v647 = vmin.f32 %v631, 0.0
        %v648 = vmin.f32 %v632, 0.0
        %v649 = vmin.f32 %v633, 0.0
        %v650 = vmin.f32 %v634, 0.0
        %v651 = vmin.f32 %v635, 0.0
        %v652 = vmin.f32 %v636, 0.0
        %v653 = vmin.f32 %v637, 0.0
        %v654 = vmin.f32 %v638, 0.0
        %v655 = vmin.f32 %v639, 0.0
        %v656 = vmin.f32 %v640, 0.0
        %v657 = vmin.f32 %v641, 0.0
        %v658 = vmin.f32 %v642, 0.0
        %v659 = vmin.f32 %v643, 0.0
        %v660 = vmin.f32 %v644, 0.0
        %v661 = vmin.f32 %v645, 0.0
        %v662 = vmin.f32 %v646, 0.0
        %v663 = vmul.f32 %v647, 1.442695
        %v664 = vpow.pop %v663
        %v665 = vmul.f32 %v648, 1.442695
        %v666 = vpow.pop %v665
        %v667 = vmul.f32 %v649, 1.442695
        %v668 = vpow.pop %v667
        %v669 = vmul.f32 %v650, 1.442695
        %v670 = vpow.pop %v669
        %v671 = vmul.f32 %v651, 1.442695
        %v672 = vpow.pop %v671
        %v673 = vmul.f32 %v652, 1.442695
        %v674 = vpow.pop %v673
        %v675 = vmul.f32 %v653, 1.442695
        %v676 = vpow.pop %v675
        %v677 = vmul.f32 %v654, 1.442695
        %v678 = vpow.pop %v677
        %v679 = vmul.f32 %v655, 1.442695
        %v680 = vpow.pop %v679
        %v681 = vmul.f32 %v656, 1.442695
        %v682 = vpow.pop %v681
        %v683 = vmul.f32 %v657, 1.442695
        %v684 = vpow.pop %v683
        %v685 = vmul.f32 %v658, 1.442695
        %v686 = vpow.pop %v685
        %v687 = vmul.f32 %v659, 1.442695
        %v688 = vpow.pop %v687
        %v689 = vmul.f32 %v660, 1.442695
        %v690 = vpow.pop %v689
        %v691 = vmul.f32 %v661, 1.442695
        %v692 = vpow.pop %v691
        %v693 = vmul.f32 %v662, 1.442695
        %v694 = vpow.pop %v693
        %v695 = vld [vmem:[%s404] sm:$0x1]
        %696 = vmatpush.msra.mxu0 %v694
        %697 = vmatpush.msra.mxu0 %v692
        %698 = vmatpush.msra.mxu0 %v690
        %699 = vmatpush.msra.mxu0 %v688
        %700 = vmatpush.msra.mxu0 %v686
        %701 = vmatpush.msra.mxu0 %v684
        %702 = vmatpush.msra.mxu0 %v682
        %703 = vmatpush.msra.mxu0 %v680
        %704 = vmatpush.msra.mxu0 %v678
        %705 = vmatpush.msra.mxu0 %v676
        %706 = vmatpush.msra.mxu0 %v674
        %707 = vmatpush.msra.mxu0 %v672
        %708 = vmatpush.msra.mxu0 %v670
        %709 = vmatpush.msra.mxu0 %v668
        %710 = vmatpush.msra.mxu0 %v666
        %711 = vmatpush.msra.mxu0 %v664
        %712 = vmatmul.f32.gmra.mxu0 %v695
        %v713 = vpop.f32.mrf.mxu0
        %v714 = vadd.f32 0.0, %v713
        %715 = vdwg.mxu0
        %s716 = sadd.s32 %s47, %s48
        %s717 = sld [smem:[#allocation5 + %s716]]
        %s718 = scvt.s32.f32 %s717
        %v719 = vld [vmem:[%s377] sm:$0x1]
        %v720 = vld [vmem:[%s412 + $0x1] sm:$0x1]
        %v721 = vstv %s718
        %v722 = vmul.f32 %v721, %v720
        %v723 = vmul.f32 %v722, %v714
        %v724 = vadd.f32 %v719, %v723
        %725 = vst [vmem:[%s377] sm:$0x1] %v724
        %s726 = sand.u32 %s213, 1
        %s727 = scalar_lea.sflag [#allocation8], %s726
        %s728 = sand.u32 %s213, 1
        %s729 = scalar_lea.vmem [#allocation9], %s728
        // Predicated region
        $region49: #{tpu_custom_call.1} parent=39 // pred_check
          %p730 = pneg %p223
        $region50: #{tpu_custom_call.1} parent=39 // pred_check_branch
          %732 = sbr.rel (%p730) target = $region52
        $region51: #{tpu_custom_call.1} parent=39 // pred_region
          %734 = vsyncadd %s727, 0
          %s735 = scalar_lea.hbm %s8, %s47
          %s737 = sshll.u32 %s729, 4
          %s738 = int_to_ptr.vmem [resolvable:$true] %s737
          %s739 = sshll.u32 %s735, 4
          %s740 = int_to_ptr.hbm [resolvable:$true] %s739
          %742 = dma.vmem_to_hbm [thread:$0]  %s738, 16, %s740, %s727
        $region52: #{tpu_custom_call.1} parent=39 // pred_fallthru
          _
      $region40: #{tpu_custom_call.1} parent=5 // pred_fallthru
        _
      %p743 = scmp.le.s32.totalorder 2, %s38
      // Predicated region
      $region53: #{tpu_custom_call.1} parent=5 // pred_check
        %p744 = pneg %p743
      $region54: #{tpu_custom_call.1} parent=5 // pred_check_branch
        %746 = sbr.rel (%p744) target = $region56
      $region55: #{tpu_custom_call.1} parent=5 // pred_region
        %s747 = ssub.s32 %s38, 2
        // Predicated region
        $region57: #{tpu_custom_call.1} parent=55 // pred_check
          %p748 = pneg %p229
        $region58: #{tpu_custom_call.1} parent=55 // pred_check_branch
          %750 = sbr.rel (%p748) target = $region60
        $region59: #{tpu_custom_call.1} parent=55 // pred_region
          %s751 = sand.u32 %s214, 1
          %s752 = scalar_lea.sflag [#allocation8], %s751
          %s753 = sand.u32 %s214, 1
          %s754 = scalar_lea.vmem [#allocation9], %s753
          %756 = dma.done %s752, 16
        $region60: #{tpu_custom_call.1} parent=55 // pred_fallthru
          _
      $region56: #{tpu_custom_call.1} parent=5 // pred_fallthru
        _
    $region6: #{tpu_custom_call.1} parent=1 // loop_footer
      %s42 = sadd.s32 1, %s38
    $region7: #{tpu_custom_call.1} parent=1 // loop_footer_branch
      %37 = sbr.rel target = $region3
    $region8: #{tpu_custom_call.1} parent=1 // loop_exit
      _
    %757 = vsyncpa [#allocation7], 1
    %s758 = scalar_lea.sflag [#allocation7], 1
    %759 = vsyncpa %s758, 1
    %760 = vsyncpa [#allocation8], 1
    %s761 = scalar_lea.sflag [#allocation8], 1
    %762 = vsyncpa %s761, 1

</llo_original>
